<compile_context>
chip_gen: v7x
topology: tpu7x:2x2x1
jax: 0.10.0
libtpu: 0.0.40
codegen_flags: <defaults>
</compile_context>

<pallas_src>
import jax
import jax.numpy as jnp
from jax.experimental import pallas as pl
from jax.experimental.pallas import tpu as pltpu

IN_DIM = 28 * 28   # 784
H1 = 256
H2 = 64
OUT = 10
H2_PAD = 128       # hidden-2 lane dim padded 64 -> 128
OUT_PAD = 128      # output lane dim padded 10 -> 128


def mlp_kernel(x_ref, w1_ref, b1_ref, w2_ref, b2_ref, w3_ref, b3_ref, o_ref):
    # Cast x to bf16 in VMEM (no extra HBM pass); no-op if the caller passed bf16.
    x = x_ref[...].astype(jnp.bfloat16)
    # fc1 + ReLU: [TB,784](bf16) @ [784,256](bf16) -> f32
    h1 = jnp.dot(x, w1_ref[...], preferred_element_type=jnp.float32)
    h1 = jnp.maximum(h1 + b1_ref[...], 0.0)
    # fc2 + ReLU: [TB,256] @ [256,128]  (columns 64..127 zero-padded)
    h2 = jnp.dot(h1.astype(jnp.bfloat16), w2_ref[...],
                 preferred_element_type=jnp.float32)
    h2 = jnp.maximum(h2 + b2_ref[...], 0.0)
    # fc3: [TB,128] @ [128,128]  (rows 64..127 and columns 10..127 zero-padded)
    o = jnp.dot(h2.astype(jnp.bfloat16), w3_ref[...],
                preferred_element_type=jnp.float32)
    o_ref[...] = (o + b3_ref[...]).astype(o_ref.dtype)


def prepare_params(params):
    """One-time weight prep (do NOT run per forward call):
    transpose to [in,out], zero-pad lane dims to 128, cast matmul operands to bf16."""
    w1, b1 = params["fc1"]   # [256, 784], [256]
    w2, b2 = params["fc2"]   # [ 64, 256], [ 64]
    w3, b3 = params["fc3"]   # [ 10,  64], [ 10]

    w1t = w1.T.astype(jnp.bfloat16)                                    # [784, 256]
    b1r = b1[None, :].astype(jnp.float32)                              # [1, 256]

    w2t = jnp.zeros((H1, H2_PAD), jnp.bfloat16).at[:, :H2].set(
        w2.T.astype(jnp.bfloat16))                                     # [256, 128]
    b2r = jnp.zeros((1, H2_PAD), jnp.float32).at[:, :H2].set(b2)       # [1, 128]

    w3t = jnp.zeros((H2_PAD, OUT_PAD), jnp.bfloat16).at[:H2, :OUT].set(
        w3.T.astype(jnp.bfloat16))                                     # [128, 128]
    b3r = jnp.zeros((1, OUT_PAD), jnp.float32).at[:, :OUT].set(b3)     # [1, 128]
    return (w1t, b1r, w2t, b2r, w3t, b3r)


def _round_up(a, m):
    return (a + m - 1) // m * m


def _choose_tile(b, block_b):
    """>=2 balanced tiles once the batch is non-trivial (v7x megacore), capped at
    block_b rows to amortize the ~0.35us per-grid-step overhead."""
    if b <= 8:
        return 8
    return min(block_b, _round_up(pl.cdiv(b, 2), 8))


def mlp_forward(x, prepped, *, block_b=1024, out_dtype=jnp.bfloat16,
                slice_output=True):
    """x: [B, 784] float32 (or bfloat16 for the low-traffic path).
    prepped: output of prepare_params.
    Returns [B, 10] logits (or the padded [B, 128] block if slice_output=False)."""
    w1t, b1r, w2t, b2r, w3t, b3r = prepped
    B = x.shape[0]

    # Tiny-batch corner case only: keep the block's sublane dim a multiple of 8.
    b_eff = B
    if B < 8:
        x = jnp.pad(x, ((0, 8 - B), (0, 0)))
        b_eff = 8

    tb = _choose_tile(b_eff, block_b)
    num_tiles = pl.cdiv(b_eff, tb)   # ragged last block handled by Pallas masking

    out_itemsize = jnp.zeros((), out_dtype).dtype.itemsize
    flops = 2 * b_eff * (IN_DIM * H1 + H1 * H2_PAD + H2_PAD * OUT_PAD)
    bytes_accessed = (
        b_eff * IN_DIM * x.dtype.itemsize
        + (IN_DIM * H1 + H1 * H2_PAD + H2_PAD * OUT_PAD) * 2
        + (H1 + H2_PAD + OUT_PAD) * 4
        + b_eff * OUT_PAD * out_itemsize)

    # TODO(synk): for the latency-bound tiny-batch path (B<=64, one grid step) the
    # ~0.9 MiB weight DMA dominates; a cross-pallas_call weight-prefetch future (P10)
    # would hide it but needs a persistent-VMEM call structure not implemented here.
    const = lambda i: (0, 0)
    out = pl.pallas_call(
        mlp_kernel,
        out_shape=jax.ShapeDtypeStruct((b_eff, OUT_PAD), out_dtype),
        grid=(num_tiles,),
        in_specs=[
            pl.BlockSpec((tb, IN_DIM), lambda i: (i, 0)),   # x tile (pipelined)
            pl.BlockSpec((IN_DIM, H1), const),              # w1
            pl.BlockSpec((1, H1), const),                   # b1
            pl.BlockSpec((H1, H2_PAD), const),              # w2 (padded)
            pl.BlockSpec((1, H2_PAD), const),               # b2 (padded)
            pl.BlockSpec((H2_PAD, OUT_PAD), const),         # w3 (padded)
            pl.BlockSpec((1, OUT_PAD), const),              # b3 (padded)
        ],
        out_specs=pl.BlockSpec((tb, OUT_PAD), lambda i: (i, 0)),
        compiler_params=pltpu.CompilerParams(
            dimension_semantics=("parallel",),
            vmem_limit_bytes=32 * 1024 * 1024),
        cost_estimate=pl.CostEstimate(
            flops=flops, transcendentals=0, bytes_accessed=bytes_accessed),
    )(x, w1t, b1r, w2t, b2r, w3t, b3r)

    if b_eff != B:
        out = out[:B]
    return out[:, :OUT] if slice_output else out


def init_params(key):
    """Deterministic init matching nn.Linear's U(-1/sqrt(fan_in), +1/sqrt(fan_in))."""
    dims = [(IN_DIM, H1), (H1, H2), (H2, OUT)]
    names = ["fc1", "fc2", "fc3"]
    params = {}
    for name, (fan_in, fan_out) in zip(names, dims):
        key, kw, kb = jax.random.split(key, 3)
        bound = 1.0 / jnp.sqrt(jnp.float32(fan_in))
        w = jax.random.uniform(kw, (fan_out, fan_in), jnp.float32, -bound, bound)
        b = jax.random.uniform(kb, (fan_out,), jnp.float32, -bound, bound)
        params[name] = (w, b)
    return params


def reference_forward_f32(x, params):
    """Pure f32 reference matching the PyTorch module."""
    w1, b1 = params["fc1"]
    w2, b2 = params["fc2"]
    w3, b3 = params["fc3"]
    h = jnp.maximum(x @ w1.T + b1, 0.0)
    h = jnp.maximum(h @ w2.T + b2, 0.0)
    return h @ w3.T + b3


def reference_forward_bf16(x, prepped):
    """Reference with the same bf16-operand / f32-accumulate math as the kernel."""
    w1t, b1r, w2t, b2r, w3t, b3r = prepped
    h1 = jnp.dot(x.astype(jnp.bfloat16), w1t, preferred_element_type=jnp.float32)
    h1 = jnp.maximum(h1 + b1r, 0.0)
    h2 = jnp.dot(h1.astype(jnp.bfloat16), w2t, preferred_element_type=jnp.float32)
    h2 = jnp.maximum(h2 + b2r, 0.0)
    o = jnp.dot(h2.astype(jnp.bfloat16), w3t, preferred_element_type=jnp.float32)
    return (o + b3r)[:, :OUT]


if __name__ == "__main__":
    key = jax.random.PRNGKey(0)
    kx, kx2, kp = jax.random.split(key, 3)
    params = init_params(kp)
    prepped = prepare_params(params)   # one-time prep, outside the steady-state path

    # Small latency-bound case (B=8): single grid step, whole batch as one tile.
    B = 8
    x = jax.random.normal(kx, (B, IN_DIM), jnp.float32)
    out = jax.block_until_ready(mlp_forward(x, prepped))
    assert out.shape == (B, OUT), out.shape
    ref_bf16 = reference_forward_bf16(x, prepped)
    ref_f32 = reference_forward_f32(x, params)
    assert jnp.allclose(out.astype(jnp.float32), ref_bf16, atol=1e-2, rtol=1e-2), \
        "mismatch vs bf16 reference (B=8)"
    assert jnp.allclose(out.astype(jnp.float32), ref_f32, atol=6e-2, rtol=6e-2), \
        "mismatch vs f32 reference (B=8)"

    # Ragged multi-tile case: B=200 -> tb=104, grid=(2,), masked partial last block,
    # no wrapper-side pad/cast copies over x.
    B2 = 200
    x2 = jax.random.normal(kx2, (B2, IN_DIM), jnp.float32)
    out2 = jax.block_until_ready(mlp_forward(x2, prepped))
    assert out2.shape == (B2, OUT), out2.shape
    ref2 = reference_forward_bf16(x2, prepped)
    assert jnp.allclose(out2.astype(jnp.float32), ref2, atol=1e-2, rtol=1e-2), \
        "mismatch vs bf16 reference (B=200)"

    # Caller-provided bf16 x (halves input HBM traffic): identical math, same result.
    out3 = jax.block_until_ready(mlp_forward(x2.astype(jnp.bfloat16), prepped))
    assert jnp.allclose(out3.astype(jnp.float32), ref2, atol=1e-2, rtol=1e-2), \
        "mismatch vs bf16 reference (bf16 input path)"

    print("KERNEL_OK")
</pallas_src>

<mosaic_0001>
module attributes {stable_mosaic.version = 11 : i64} {
  func.func @mlp_kernel(%arg0: i32, %arg1: memref<8x784xf32, #tpu.memory_space<vmem>>, %arg2: memref<784x256xbf16, #tpu.memory_space<vmem>>, %arg3: memref<1x256xf32, #tpu.memory_space<vmem>>, %arg4: memref<256x128xbf16, #tpu.memory_space<vmem>>, %arg5: memref<1x128xf32, #tpu.memory_space<vmem>>, %arg6: memref<128x128xbf16, #tpu.memory_space<vmem>>, %arg7: memref<1x128xf32, #tpu.memory_space<vmem>>, %arg8: memref<8x128xbf16, #tpu.memory_space<vmem>>) attributes {dimension_semantics = [#tpu.dimension_semantics<parallel>], iteration_bounds = array<i64: 1>, scalar_prefetch = 0 : i64, scratch_operands = 0 : i64, tpu.core_type = #tpu.core_type<tc>, window_params = [{transform_indices = @transform_0, window_bounds = array<i64: 8, 784>}, {pipeline_mode = #tpu.pipeline_mode<synchronous>, transform_indices = @transform_1, window_bounds = array<i64: 784, 256>}, {pipeline_mode = #tpu.pipeline_mode<synchronous>, transform_indices = @transform_2, window_bounds = array<i64: 1, 256>}, {pipeline_mode = #tpu.pipeline_mode<synchronous>, transform_indices = @transform_3, window_bounds = array<i64: 256, 128>}, {pipeline_mode = #tpu.pipeline_mode<synchronous>, transform_indices = @transform_4, window_bounds = array<i64: 1, 128>}, {pipeline_mode = #tpu.pipeline_mode<synchronous>, transform_indices = @transform_5, window_bounds = array<i64: 128, 128>}, {pipeline_mode = #tpu.pipeline_mode<synchronous>, transform_indices = @transform_6, window_bounds = array<i64: 1, 128>}, {transform_indices = @transform_7, window_bounds = array<i64: 8, 128>}]} {
    %c0 = arith.constant 0 : index
    %c0_0 = arith.constant 0 : index
    %0 = vector.load %arg1[%c0, %c0_0] : memref<8x784xf32, #tpu.memory_space<vmem>>, vector<8x784xf32>
    %1 = arith.truncf %0 : vector<8x784xf32> to vector<8x784xbf16>
    %c0_1 = arith.constant 0 : index
    %c0_2 = arith.constant 0 : index
    %2 = vector.load %arg2[%c0_1, %c0_2] : memref<784x256xbf16, #tpu.memory_space<vmem>>, vector<784x256xbf16>
    %cst = arith.constant dense<0.000000e+00> : vector<8x256xf32>
    %3 = tpu.matmul %1, %2, %cst {dimension_numbers = #tpu.dot_dimension_numbers<[1], [0], [0], [1], [0, 0, 1, 1], [], []>} : vector<8x784xbf16>, vector<784x256xbf16>, vector<8x256xf32> -> vector<8x256xf32>
    %c0_3 = arith.constant 0 : index
    %c0_4 = arith.constant 0 : index
    %4 = vector.load %arg3[%c0_3, %c0_4] : memref<1x256xf32, #tpu.memory_space<vmem>>, vector<1x256xf32>
    %5 = vector.broadcast %4 : vector<1x256xf32> to vector<8x256xf32>
    %6 = arith.addf %3, %5 : vector<8x256xf32>
    %cst_5 = arith.constant 0.000000e+00 : f32
    %7 = vector.broadcast %cst_5 : f32 to vector<8x256xf32>
    %8 = arith.maximumf %6, %7 : vector<8x256xf32>
    %9 = arith.truncf %8 : vector<8x256xf32> to vector<8x256xbf16>
    %c0_6 = arith.constant 0 : index
    %c0_7 = arith.constant 0 : index
    %10 = vector.load %arg4[%c0_6, %c0_7] : memref<256x128xbf16, #tpu.memory_space<vmem>>, vector<256x128xbf16>
    %cst_8 = arith.constant dense<0.000000e+00> : vector<8x128xf32>
    %11 = tpu.matmul %9, %10, %cst_8 {dimension_numbers = #tpu.dot_dimension_numbers<[1], [0], [0], [1], [0, 0, 1, 1], [], []>} : vector<8x256xbf16>, vector<256x128xbf16>, vector<8x128xf32> -> vector<8x128xf32>
    %c0_9 = arith.constant 0 : index
    %c0_10 = arith.constant 0 : index
    %12 = vector.load %arg5[%c0_9, %c0_10] : memref<1x128xf32, #tpu.memory_space<vmem>>, vector<1x128xf32>
    %13 = vector.broadcast %12 : vector<1x128xf32> to vector<8x128xf32>
    %14 = arith.addf %11, %13 : vector<8x128xf32>
    %cst_11 = arith.constant 0.000000e+00 : f32
    %15 = vector.broadcast %cst_11 : f32 to vector<8x128xf32>
    %16 = arith.maximumf %14, %15 : vector<8x128xf32>
    %17 = arith.truncf %16 : vector<8x128xf32> to vector<8x128xbf16>
    %c0_12 = arith.constant 0 : index
    %c0_13 = arith.constant 0 : index
    %18 = vector.load %arg6[%c0_12, %c0_13] : memref<128x128xbf16, #tpu.memory_space<vmem>>, vector<128x128xbf16>
    %cst_14 = arith.constant dense<0.000000e+00> : vector<8x128xf32>
    %19 = tpu.matmul %17, %18, %cst_14 {dimension_numbers = #tpu.dot_dimension_numbers<[1], [0], [0], [1], [0, 0, 1, 1], [], []>} : vector<8x128xbf16>, vector<128x128xbf16>, vector<8x128xf32> -> vector<8x128xf32>
    %c0_15 = arith.constant 0 : index
    %c0_16 = arith.constant 0 : index
    %20 = vector.load %arg7[%c0_15, %c0_16] : memref<1x128xf32, #tpu.memory_space<vmem>>, vector<1x128xf32>
    %21 = vector.broadcast %20 : vector<1x128xf32> to vector<8x128xf32>
    %22 = arith.addf %19, %21 : vector<8x128xf32>
    %23 = arith.truncf %22 : vector<8x128xf32> to vector<8x128xbf16>
    %c0_17 = arith.constant 0 : index
    %c0_18 = arith.constant 0 : index
    %24 = vector.load %arg8[%c0_17, %c0_18] : memref<8x128xbf16, #tpu.memory_space<vmem>>, vector<8x128xbf16>
    tpu.vector_store %arg8[%c0_17, %c0_18], %23 {strides = array<i32>} : memref<8x128xbf16, #tpu.memory_space<vmem>>, vector<8x128xbf16>,
    return
  }
  func.func @transform_0(%arg0: i32) -> (i32, i32) {
    %c0_i32 = arith.constant 0 : i32
    %c0_i32_0 = arith.constant 0 : i32
    return %arg0, %c0_i32 : i32, i32
  }
  func.func @transform_1(%arg0: i32) -> (i32, i32) {
    %c0_i32 = arith.constant 0 : i32
    %c0_i32_0 = arith.constant 0 : i32
    %c0_i32_1 = arith.constant 0 : i32
    return %c0_i32, %c0_i32_0 : i32, i32
  }
  func.func @transform_2(%arg0: i32) -> (i32, i32) {
    %c0_i32 = arith.constant 0 : i32
    %c0_i32_0 = arith.constant 0 : i32
    %c0_i32_1 = arith.constant 0 : i32
    return %c0_i32, %c0_i32_0 : i32, i32
  }
  func.func @transform_3(%arg0: i32) -> (i32, i32) {
    %c0_i32 = arith.constant 0 : i32
    %c0_i32_0 = arith.constant 0 : i32
    %c0_i32_1 = arith.constant 0 : i32
    return %c0_i32, %c0_i32_0 : i32, i32
  }
  func.func @transform_4(%arg0: i32) -> (i32, i32) {
    %c0_i32 = arith.constant 0 : i32
    %c0_i32_0 = arith.constant 0 : i32
    %c0_i32_1 = arith.constant 0 : i32
    return %c0_i32, %c0_i32_0 : i32, i32
  }
  func.func @transform_5(%arg0: i32) -> (i32, i32) {
    %c0_i32 = arith.constant 0 : i32
    %c0_i32_0 = arith.constant 0 : i32
    %c0_i32_1 = arith.constant 0 : i32
    return %c0_i32, %c0_i32_0 : i32, i32
  }
  func.func @transform_6(%arg0: i32) -> (i32, i32) {
    %c0_i32 = arith.constant 0 : i32
    %c0_i32_0 = arith.constant 0 : i32
    %c0_i32_1 = arith.constant 0 : i32
    return %c0_i32, %c0_i32_0 : i32, i32
  }
  func.func @transform_7(%arg0: i32) -> (i32, i32) {
    %c0_i32 = arith.constant 0 : i32
    %c0_i32_0 = arith.constant 0 : i32
    return %arg0, %c0_i32 : i32, i32
  }
}

</mosaic_0001>

<llo_original>
// kernel: tpu_custom_call.1
$region0: #{tpu_custom_call.1}
  #allocation0 [shape = 'u32[]', space=smem, size = 0x4, offset = 0x4, fixed_abs, tag = 'smem constant byte address 0x4 - core index']
  #allocation1 [shape = 'u32[144,128]{1,0:T(1,128)}', space=vmem, size = 0x12000, scoped, tag = 'internal scratch']
  %s0 = inlined_call_operand.hbm [shape: f32[8,784], index: 0, kind: input, shape index: {}]
  %s1 = inlined_call_operand.hbm [shape: bf16[784,256], index: 1, kind: input, shape index: {}]
  %s2 = inlined_call_operand.vmem [shape: f32[1,256], index: 2, kind: input, shape index: {}]
  %s3 = inlined_call_operand.hbm [shape: bf16[256,128], index: 3, kind: input, shape index: {}]
  %s4 = inlined_call_operand.vmem [shape: f32[1,128], index: 4, kind: input, shape index: {}]
  %s5 = inlined_call_operand.hbm [shape: bf16[128,128], index: 5, kind: input, shape index: {}]
  %s6 = inlined_call_operand.vmem [shape: f32[1,128], index: 6, kind: input, shape index: {}]
  %s7 = inlined_call_operand.hbm [shape: bf16[8,128], index: 7, kind: output, shape index: {}]
  %s8 = sld [smem:[#allocation0]]
  $region54: #{tpu_custom_call.1} parent=0
    _
  %s10 = ssub.s32 1, %s8
  %s11 = scalar_select 0, %s10, %s8
  $region1: #{tpu_custom_call.1} parent=0
    #allocation2 [shape = 'u8[28672]{0}', space=vmem, size = 0x7000, scoped, tag = 'input window, operand 0, single buffered']
    #allocation3 [shape = 's32[1]{0}', space=sflag, size = 0x4, scoped, tag = 'scoped memory for tpu_custom_call.1']
    #allocation4 [shape = 's32[1]{0}', space=sflag, size = 0x4, scoped, tag = 'scoped memory for tpu_custom_call.1']
    #allocation5 [shape = 'u8[401408]{0}', space=vmem, size = 0x62000, scoped, tag = 'input window, operand 1, single buffered']
    #allocation6 [shape = 's32[1]{0}', space=sflag, size = 0x4, scoped, tag = 'scoped memory for tpu_custom_call.1']
    #allocation7 [shape = 'u8[65536]{0}', space=vmem, size = 0x10000, scoped, tag = 'input window, operand 3, single buffered']
    #allocation8 [shape = 'u8[32768]{0}', space=vmem, size = 0x8000, scoped, tag = 'input window, operand 5, single buffered']
    #allocation9 [shape = 's32[1]{0}', space=sflag, size = 0x4, scoped, tag = 'scoped memory for tpu_custom_call.1']
    #allocation10 [shape = 'u8[2048]{0}', space=vmem, size = 0x800, scoped, tag = 'output window, operand 0, single buffered']
    %12 = vsyncpa [#allocation3], 0
    %13 = vsyncpa [#allocation6], 0
    %14 = vsyncpa [#allocation9], 0
    %15 = vsyncpa [#allocation4], 0
    // Predicated region
    $region2: #{tpu_custom_call.1} parent=1 // pred_check
      _
    $region3: #{tpu_custom_call.1} parent=1 // pred_check_branch
      %17 = sbr.rel (0) target = $region5
    $region4: #{tpu_custom_call.1} parent=1 // pred_region
      %s19 = ssub.s32 896, 896
      %20 = vsyncadd [#allocation3], %s19
      %s22 = sshll.u32 [#allocation2], 4
      %s23 = int_to_ptr.vmem [resolvable:$true] %s22
      %25 = dma.hbm_to_vmem [thread:$0]  %s0, 896, %s23, [#allocation3]
    $region5: #{tpu_custom_call.1} parent=1 // pred_fallthru
      _
    // Predicated region
    $region6: #{tpu_custom_call.1} parent=1 // pred_check
      _
    $region7: #{tpu_custom_call.1} parent=1 // pred_check_branch
      %27 = sbr.rel (0) target = $region9
    $region8: #{tpu_custom_call.1} parent=1 // pred_region
      %s29 = ssub.s32 12544, 12544
      %30 = vsyncadd [#allocation6], %s29
      %s31 = sshll.u32 [#allocation5], 4
      %s32 = int_to_ptr.vmem [resolvable:$true] %s31
      %37 = dma.hbm_to_vmem [thread:$0]  %s1, 12544, %s32, [#allocation6], 128, 128, 8
    $region9: #{tpu_custom_call.1} parent=1 // pred_fallthru
      _
    // Predicated region
    $region10: #{tpu_custom_call.1} parent=1 // pred_check
      _
    $region11: #{tpu_custom_call.1} parent=1 // pred_check_branch
      %39 = sbr.rel (0) target = $region13
    $region12: #{tpu_custom_call.1} parent=1 // pred_region
      _
    $region13: #{tpu_custom_call.1} parent=1 // pred_fallthru
      _
    // Predicated region
    $region14: #{tpu_custom_call.1} parent=1 // pred_check
      _
    $region15: #{tpu_custom_call.1} parent=1 // pred_check_branch
      %41 = sbr.rel (0) target = $region17
    $region16: #{tpu_custom_call.1} parent=1 // pred_region
      %s43 = ssub.s32 2048, 2048
      %44 = vsyncadd [#allocation6], %s43
      %s45 = sshll.u32 [#allocation7], 4
      %s46 = int_to_ptr.vmem [resolvable:$true] %s45
      %51 = dma.hbm_to_vmem [thread:$0]  %s3, 2048, %s46, [#allocation6], 64, 64, 4
    $region17: #{tpu_custom_call.1} parent=1 // pred_fallthru
      _
    // Predicated region
    $region18: #{tpu_custom_call.1} parent=1 // pred_check
      _
    $region19: #{tpu_custom_call.1} parent=1 // pred_check_branch
      %53 = sbr.rel (0) target = $region21
    $region20: #{tpu_custom_call.1} parent=1 // pred_region
      _
    $region21: #{tpu_custom_call.1} parent=1 // pred_fallthru
      _
    // Predicated region
    $region22: #{tpu_custom_call.1} parent=1 // pred_check
      _
    $region23: #{tpu_custom_call.1} parent=1 // pred_check_branch
      %55 = sbr.rel (0) target = $region25
    $region24: #{tpu_custom_call.1} parent=1 // pred_region
      %s57 = ssub.s32 1024, 1024
      %58 = vsyncadd [#allocation9], %s57
      %s59 = sshll.u32 [#allocation8], 4
      %s60 = int_to_ptr.vmem [resolvable:$true] %s59
      %65 = dma.hbm_to_vmem [thread:$0]  %s5, 1024, %s60, [#allocation9], 64, 64, 4
    $region25: #{tpu_custom_call.1} parent=1 // pred_fallthru
      _
    // Predicated region
    $region26: #{tpu_custom_call.1} parent=1 // pred_check
      _
    $region27: #{tpu_custom_call.1} parent=1 // pred_check_branch
      %67 = sbr.rel (0) target = $region29
    $region28: #{tpu_custom_call.1} parent=1 // pred_region
      _
    $region29: #{tpu_custom_call.1} parent=1 // pred_fallthru
      _
    // Predicated region
    $region30: #{tpu_custom_call.1} parent=1 // pred_check
      _
    $region31: #{tpu_custom_call.1} parent=1 // pred_check_branch
      %69 = sbr.rel (0) target = $region33
    $region32: #{tpu_custom_call.1} parent=1 // pred_region
      %70 = dma.done [#allocation3], 896
    $region33: #{tpu_custom_call.1} parent=1 // pred_fallthru
      _
    // Predicated region
    $region34: #{tpu_custom_call.1} parent=1 // pred_check
      _
    $region35: #{tpu_custom_call.1} parent=1 // pred_check_branch
      %72 = sbr.rel (0) target = $region37
    $region36: #{tpu_custom_call.1} parent=1 // pred_region
      %73 = dma.done [#allocation6], 12544
    $region37: #{tpu_custom_call.1} parent=1 // pred_fallthru
      _
    // Predicated region
    $region38: #{tpu_custom_call.1} parent=1 // pred_check
      _
    $region39: #{tpu_custom_call.1} parent=1 // pred_check_branch
      %75 = sbr.rel (0) target = $region41
    $region40: #{tpu_custom_call.1} parent=1 // pred_region
      %76 = dma.done [#allocation6], 2048
    $region41: #{tpu_custom_call.1} parent=1 // pred_fallthru
      _
    // Predicated region
    $region42: #{tpu_custom_call.1} parent=1 // pred_check
      _
    $region43: #{tpu_custom_call.1} parent=1 // pred_check_branch
      %78 = sbr.rel (0) target = $region45
    $region44: #{tpu_custom_call.1} parent=1 // pred_region
      %79 = dma.done [#allocation9], 1024
    $region45: #{tpu_custom_call.1} parent=1 // pred_fallthru
      _
    %v81 = vld [vmem:[#allocation2] sm:$0xff]
    %v82 = vld [vmem:[#allocation2 + $0x8] sm:$0xff]
    %v83 = vld [vmem:[#allocation2 + $0x10] sm:$0xff]
    %v84 = vld [vmem:[#allocation2 + $0x18] sm:$0xff]
    %v85 = vld [vmem:[#allocation2 + $0x20] sm:$0xff]
    %v86 = vld [vmem:[#allocation2 + $0x28] sm:$0xff]
    %v87 = vld [vmem:[#allocation2 + $0x30] sm:$0xff]
    %v88 = vpack.c.bf16 %v81, %v81
    %v89 = vpack.c.bf16 %v82, %v82
    %v90 = vpack.c.bf16 %v83, %v83
    %v91 = vpack.c.bf16 %v84, %v84
    %v92 = vpack.c.bf16 %v85, %v85
    %v93 = vpack.c.bf16 %v86, %v86
    %v94 = vpack.c.bf16 %v87, %v87
    %v95 = vld [vmem:[#allocation5] sm:$0xff]
    %v96 = vld [vmem:[#allocation5 + $0x8] sm:$0xff]
    %v97 = vld [vmem:[#allocation5 + $0x10] sm:$0xff]
    %v98 = vld [vmem:[#allocation5 + $0x18] sm:$0xff]
    %v99 = vld [vmem:[#allocation5 + $0x20] sm:$0xff]
    %v100 = vld [vmem:[#allocation5 + $0x28] sm:$0xff]
    %v101 = vld [vmem:[#allocation5 + $0x30] sm:$0xff]
    %v102 = vld [vmem:[#allocation5 + $0x38] sm:$0xff]
    %v103 = vld [vmem:[#allocation5 + $0x40] sm:$0xff]
    %v104 = vld [vmem:[#allocation5 + $0x48] sm:$0xff]
    %v105 = vld [vmem:[#allocation5 + $0x50] sm:$0xff]
    %v106 = vld [vmem:[#allocation5 + $0x58] sm:$0xff]
    %v107 = vld [vmem:[#allocation5 + $0x60] sm:$0xff]
    %v108 = vld [vmem:[#allocation5 + $0x68] sm:$0xff]
    %v109 = vld [vmem:[#allocation5 + $0x70] sm:$0xff]
    %v110 = vld [vmem:[#allocation5 + $0x78] sm:$0xff]
    %v111 = vld [vmem:[#allocation5 + $0x80] sm:$0xff]
    %v112 = vld [vmem:[#allocation5 + $0x88] sm:$0xff]
    %v113 = vld [vmem:[#allocation5 + $0x90] sm:$0xff]
    %v114 = vld [vmem:[#allocation5 + $0x98] sm:$0xff]
    %v115 = vld [vmem:[#allocation5 + $0xa0] sm:$0xff]
    %v116 = vld [vmem:[#allocation5 + $0xa8] sm:$0xff]
    %v117 = vld [vmem:[#allocation5 + $0xb0] sm:$0xff]
    %v118 = vld [vmem:[#allocation5 + $0xb8] sm:$0xff]
    %v119 = vld [vmem:[#allocation5 + $0xc0] sm:$0xff]
    %v120 = vld [vmem:[#allocation5 + $0xc8] sm:$0xff]
    %v121 = vld [vmem:[#allocation5 + $0xd0] sm:$0xff]
    %v122 = vld [vmem:[#allocation5 + $0xd8] sm:$0xff]
    %v123 = vld [vmem:[#allocation5 + $0xe0] sm:$0xff]
    %v124 = vld [vmem:[#allocation5 + $0xe8] sm:$0xff]
    %v125 = vld [vmem:[#allocation5 + $0xf0] sm:$0xff]
    %v126 = vld [vmem:[#allocation5 + $0xf8] sm:$0xff]
    %v127 = vld [vmem:[#allocation5 + $0x100] sm:$0xff]
    %v128 = vld [vmem:[#allocation5 + $0x108] sm:$0xff]
    %v129 = vld [vmem:[#allocation5 + $0x110] sm:$0xff]
    %v130 = vld [vmem:[#allocation5 + $0x118] sm:$0xff]
    %v131 = vld [vmem:[#allocation5 + $0x120] sm:$0xff]
    %v132 = vld [vmem:[#allocation5 + $0x128] sm:$0xff]
    %v133 = vld [vmem:[#allocation5 + $0x130] sm:$0xff]
    %v134 = vld [vmem:[#allocation5 + $0x138] sm:$0xff]
    %v135 = vld [vmem:[#allocation5 + $0x140] sm:$0xff]
    %v136 = vld [vmem:[#allocation5 + $0x148] sm:$0xff]
    %v137 = vld [vmem:[#allocation5 + $0x150] sm:$0xff]
    %v138 = vld [vmem:[#allocation5 + $0x158] sm:$0xff]
    %v139 = vld [vmem:[#allocation5 + $0x160] sm:$0xff]
    %v140 = vld [vmem:[#allocation5 + $0x168] sm:$0xff]
    %v141 = vld [vmem:[#allocation5 + $0x170] sm:$0xff]
    %v142 = vld [vmem:[#allocation5 + $0x178] sm:$0xff]
    %v143 = vld [vmem:[#allocation5 + $0x180] sm:$0xff]
    %v144 = vld [vmem:[#allocation5 + $0x188] sm:$0xff]
    %v145 = vld [vmem:[#allocation5 + $0x190] sm:$0xff]
    %v146 = vld [vmem:[#allocation5 + $0x198] sm:$0xff]
    %v147 = vld [vmem:[#allocation5 + $0x1a0] sm:$0xff]
    %v148 = vld [vmem:[#allocation5 + $0x1a8] sm:$0xff]
    %v149 = vld [vmem:[#allocation5 + $0x1b0] sm:$0xff]
    %v150 = vld [vmem:[#allocation5 + $0x1b8] sm:$0xff]
    %v151 = vld [vmem:[#allocation5 + $0x1c0] sm:$0xff]
    %v152 = vld [vmem:[#allocation5 + $0x1c8] sm:$0xff]
    %v153 = vld [vmem:[#allocation5 + $0x1d0] sm:$0xff]
    %v154 = vld [vmem:[#allocation5 + $0x1d8] sm:$0xff]
    %v155 = vld [vmem:[#allocation5 + $0x1e0] sm:$0xff]
    %v156 = vld [vmem:[#allocation5 + $0x1e8] sm:$0xff]
    %v157 = vld [vmem:[#allocation5 + $0x1f0] sm:$0xff]
    %v158 = vld [vmem:[#allocation5 + $0x1f8] sm:$0xff]
    %v159 = vld [vmem:[#allocation5 + $0x200] sm:$0xff]
    %v160 = vld [vmem:[#allocation5 + $0x208] sm:$0xff]
    %v161 = vld [vmem:[#allocation5 + $0x210] sm:$0xff]
    %v162 = vld [vmem:[#allocation5 + $0x218] sm:$0xff]
    %v163 = vld [vmem:[#allocation5 + $0x220] sm:$0xff]
    %v164 = vld [vmem:[#allocation5 + $0x228] sm:$0xff]
    %v165 = vld [vmem:[#allocation5 + $0x230] sm:$0xff]
    %v166 = vld [vmem:[#allocation5 + $0x238] sm:$0xff]
    %v167 = vld [vmem:[#allocation5 + $0x240] sm:$0xff]
    %v168 = vld [vmem:[#allocation5 + $0x248] sm:$0xff]
    %v169 = vld [vmem:[#allocation5 + $0x250] sm:$0xff]
    %v170 = vld [vmem:[#allocation5 + $0x258] sm:$0xff]
    %v171 = vld [vmem:[#allocation5 + $0x260] sm:$0xff]
    %v172 = vld [vmem:[#allocation5 + $0x268] sm:$0xff]
    %v173 = vld [vmem:[#allocation5 + $0x270] sm:$0xff]
    %v174 = vld [vmem:[#allocation5 + $0x278] sm:$0xff]
    %v175 = vld [vmem:[#allocation5 + $0x280] sm:$0xff]
    %v176 = vld [vmem:[#allocation5 + $0x288] sm:$0xff]
    %v177 = vld [vmem:[#allocation5 + $0x290] sm:$0xff]
    %v178 = vld [vmem:[#allocation5 + $0x298] sm:$0xff]
    %v179 = vld [vmem:[#allocation5 + $0x2a0] sm:$0xff]
    %v180 = vld [vmem:[#allocation5 + $0x2a8] sm:$0xff]
    %v181 = vld [vmem:[#allocation5 + $0x2b0] sm:$0xff]
    %v182 = vld [vmem:[#allocation5 + $0x2b8] sm:$0xff]
    %v183 = vld [vmem:[#allocation5 + $0x2c0] sm:$0xff]
    %v184 = vld [vmem:[#allocation5 + $0x2c8] sm:$0xff]
    %v185 = vld [vmem:[#allocation5 + $0x2d0] sm:$0xff]
    %v186 = vld [vmem:[#allocation5 + $0x2d8] sm:$0xff]
    %v187 = vld [vmem:[#allocation5 + $0x2e0] sm:$0xff]
    %v188 = vld [vmem:[#allocation5 + $0x2e8] sm:$0xff]
    %v189 = vld [vmem:[#allocation5 + $0x2f0] sm:$0xff]
    %v190 = vld [vmem:[#allocation5 + $0x2f8] sm:$0xff]
    %v191 = vld [vmem:[#allocation5 + $0x300] sm:$0xff]
    %v192 = vld [vmem:[#allocation5 + $0x308] sm:$0xff]
    %v193 = vld [vmem:[%s2] sm:$0x3]
    %v195 = vlaneseq
    %v196 = vshrl.u32 %v195, 7
    %v197 = vsub.s32 0, %v196
    %v198 = vrot.slane %v193, %v197
    %v199 = vlaneseq
    %v200 = vshrl.u32 %v199, 7
    %v201 = vsub.s32 1, %v200
    %v202 = vrot.slane %v193, %v201
    %v303 = vunpack.c.l.b16 %v95
    %v304 = vunpack.c.h.b16 %v95
    %v305 = vunpack.c.l.b16 %v96
    %v306 = vunpack.c.h.b16 %v96
    %v307 = vunpack.c.l.b16 %v97
    %v308 = vunpack.c.h.b16 %v97
    %v309 = vunpack.c.l.b16 %v98
    %v310 = vunpack.c.h.b16 %v98
    %v311 = vunpack.c.l.b16 %v99
    %v312 = vunpack.c.h.b16 %v99
    %v313 = vunpack.c.l.b16 %v100
    %v314 = vunpack.c.h.b16 %v100
    %v315 = vunpack.c.l.b16 %v101
    %v316 = vunpack.c.h.b16 %v101
    %v317 = vunpack.c.l.b16 %v102
    %v318 = vunpack.c.h.b16 %v102
    %v319 = vunpack.c.l.b16 %v103
    %v320 = vunpack.c.h.b16 %v103
    %v321 = vunpack.c.l.b16 %v104
    %v322 = vunpack.c.h.b16 %v104
    %v323 = vunpack.c.l.b16 %v105
    %v324 = vunpack.c.h.b16 %v105
    %v325 = vunpack.c.l.b16 %v106
    %v326 = vunpack.c.h.b16 %v106
    %v327 = vunpack.c.l.b16 %v107
    %v328 = vunpack.c.h.b16 %v107
    %v329 = vunpack.c.l.b16 %v108
    %v330 = vunpack.c.h.b16 %v108
    %v331 = vunpack.c.l.b16 %v109
    %v332 = vunpack.c.h.b16 %v109
    %v333 = vunpack.c.l.b16 %v110
    %v334 = vunpack.c.h.b16 %v110
    %v335 = vunpack.c.l.b16 %v111
    %v336 = vunpack.c.h.b16 %v111
    %v337 = vunpack.c.l.b16 %v112
    %v338 = vunpack.c.h.b16 %v112
    %v339 = vunpack.c.l.b16 %v113
    %v340 = vunpack.c.h.b16 %v113
    %v341 = vunpack.c.l.b16 %v114
    %v342 = vunpack.c.h.b16 %v114
    %v343 = vunpack.c.l.b16 %v115
    %v344 = vunpack.c.h.b16 %v115
    %v345 = vunpack.c.l.b16 %v116
    %v346 = vunpack.c.h.b16 %v116
    %v347 = vunpack.c.l.b16 %v117
    %v348 = vunpack.c.h.b16 %v117
    %v349 = vunpack.c.l.b16 %v118
    %v350 = vunpack.c.h.b16 %v118
    %v351 = vunpack.c.l.b16 %v119
    %v352 = vunpack.c.h.b16 %v119
    %v353 = vunpack.c.l.b16 %v120
    %v354 = vunpack.c.h.b16 %v120
    %v355 = vunpack.c.l.b16 %v121
    %v356 = vunpack.c.h.b16 %v121
    %v357 = vunpack.c.l.b16 %v122
    %v358 = vunpack.c.h.b16 %v122
    %v359 = vunpack.c.l.b16 %v123
    %v360 = vunpack.c.h.b16 %v123
    %v361 = vunpack.c.l.b16 %v124
    %v362 = vunpack.c.h.b16 %v124
    %v363 = vunpack.c.l.b16 %v125
    %v364 = vunpack.c.h.b16 %v125
    %v365 = vunpack.c.l.b16 %v126
    %v366 = vunpack.c.h.b16 %v126
    %v367 = vunpack.c.l.b16 %v127
    %v368 = vunpack.c.h.b16 %v127
    %v369 = vunpack.c.l.b16 %v128
    %v370 = vunpack.c.h.b16 %v128
    %v371 = vunpack.c.l.b16 %v129
    %v372 = vunpack.c.h.b16 %v129
    %v373 = vunpack.c.l.b16 %v130
    %v374 = vunpack.c.h.b16 %v130
    %v375 = vunpack.c.l.b16 %v131
    %v376 = vunpack.c.h.b16 %v131
    %v377 = vunpack.c.l.b16 %v132
    %v378 = vunpack.c.h.b16 %v132
    %v379 = vunpack.c.l.b16 %v133
    %v380 = vunpack.c.h.b16 %v133
    %v381 = vunpack.c.l.b16 %v134
    %v382 = vunpack.c.h.b16 %v134
    %v383 = vunpack.c.l.b16 %v135
    %v384 = vunpack.c.h.b16 %v135
    %v385 = vunpack.c.l.b16 %v136
    %v386 = vunpack.c.h.b16 %v136
    %v387 = vunpack.c.l.b16 %v137
    %v388 = vunpack.c.h.b16 %v137
    %v389 = vunpack.c.l.b16 %v138
    %v390 = vunpack.c.h.b16 %v138
    %v391 = vunpack.c.l.b16 %v139
    %v392 = vunpack.c.h.b16 %v139
    %v393 = vunpack.c.l.b16 %v140
    %v394 = vunpack.c.h.b16 %v140
    %v395 = vunpack.c.l.b16 %v141
    %v396 = vunpack.c.h.b16 %v141
    %v397 = vunpack.c.l.b16 %v142
    %v398 = vunpack.c.h.b16 %v142
    %v399 = vunpack.c.l.b16 %v143
    %v400 = vunpack.c.h.b16 %v143
    %v401 = vunpack.c.l.b16 %v144
    %v402 = vunpack.c.h.b16 %v144
    %v403 = vunpack.c.l.b16 %v145
    %v404 = vunpack.c.h.b16 %v145
    %v405 = vunpack.c.l.b16 %v146
    %v406 = vunpack.c.h.b16 %v146
    %v407 = vunpack.c.l.b16 %v147
    %v408 = vunpack.c.h.b16 %v147
    %v409 = vunpack.c.l.b16 %v148
    %v410 = vunpack.c.h.b16 %v148
    %v411 = vunpack.c.l.b16 %v149
    %v412 = vunpack.c.h.b16 %v149
    %v413 = vunpack.c.l.b16 %v150
    %v414 = vunpack.c.h.b16 %v150
    %v415 = vunpack.c.l.b16 %v151
    %v416 = vunpack.c.h.b16 %v151
    %v417 = vunpack.c.l.b16 %v152
    %v418 = vunpack.c.h.b16 %v152
    %v419 = vunpack.c.l.b16 %v153
    %v420 = vunpack.c.h.b16 %v153
    %v421 = vunpack.c.l.b16 %v154
    %v422 = vunpack.c.h.b16 %v154
    %v423 = vunpack.c.l.b16 %v155
    %v424 = vunpack.c.h.b16 %v155
    %v425 = vunpack.c.l.b16 %v156
    %v426 = vunpack.c.h.b16 %v156
    %v427 = vunpack.c.l.b16 %v157
    %v428 = vunpack.c.h.b16 %v157
    %v429 = vunpack.c.l.b16 %v158
    %v430 = vunpack.c.h.b16 %v158
    %v431 = vunpack.c.l.b16 %v159
    %v432 = vunpack.c.h.b16 %v159
    %v433 = vunpack.c.l.b16 %v160
    %v434 = vunpack.c.h.b16 %v160
    %v435 = vunpack.c.l.b16 %v161
    %v436 = vunpack.c.h.b16 %v161
    %v437 = vunpack.c.l.b16 %v162
    %v438 = vunpack.c.h.b16 %v162
    %v439 = vunpack.c.l.b16 %v163
    %v440 = vunpack.c.h.b16 %v163
    %v441 = vunpack.c.l.b16 %v164
    %v442 = vunpack.c.h.b16 %v164
    %v443 = vunpack.c.l.b16 %v165
    %v444 = vunpack.c.h.b16 %v165
    %v445 = vunpack.c.l.b16 %v166
    %v446 = vunpack.c.h.b16 %v166
    %v447 = vunpack.c.l.b16 %v167
    %v448 = vunpack.c.h.b16 %v167
    %v449 = vunpack.c.l.b16 %v168
    %v450 = vunpack.c.h.b16 %v168
    %v451 = vunpack.c.l.b16 %v169
    %v452 = vunpack.c.h.b16 %v169
    %v453 = vunpack.c.l.b16 %v170
    %v454 = vunpack.c.h.b16 %v170
    %v455 = vunpack.c.l.b16 %v171
    %v456 = vunpack.c.h.b16 %v171
    %v457 = vunpack.c.l.b16 %v172
    %v458 = vunpack.c.h.b16 %v172
    %v459 = vunpack.c.l.b16 %v173
    %v460 = vunpack.c.h.b16 %v173
    %v461 = vunpack.c.l.b16 %v174
    %v462 = vunpack.c.h.b16 %v174
    %v463 = vunpack.c.l.b16 %v175
    %v464 = vunpack.c.h.b16 %v175
    %v465 = vunpack.c.l.b16 %v176
    %v466 = vunpack.c.h.b16 %v176
    %v467 = vunpack.c.l.b16 %v177
    %v468 = vunpack.c.h.b16 %v177
    %v469 = vunpack.c.l.b16 %v178
    %v470 = vunpack.c.h.b16 %v178
    %v471 = vunpack.c.l.b16 %v179
    %v472 = vunpack.c.h.b16 %v179
    %v473 = vunpack.c.l.b16 %v180
    %v474 = vunpack.c.h.b16 %v180
    %v475 = vunpack.c.l.b16 %v181
    %v476 = vunpack.c.h.b16 %v181
    %v477 = vunpack.c.l.b16 %v182
    %v478 = vunpack.c.h.b16 %v182
    %v479 = vunpack.c.l.b16 %v183
    %v480 = vunpack.c.h.b16 %v183
    %v481 = vunpack.c.l.b16 %v184
    %v482 = vunpack.c.h.b16 %v184
    %v483 = vunpack.c.l.b16 %v185
    %v484 = vunpack.c.h.b16 %v185
    %v485 = vunpack.c.l.b16 %v186
    %v486 = vunpack.c.h.b16 %v186
    %v487 = vunpack.c.l.b16 %v187
    %v488 = vunpack.c.h.b16 %v187
    %v489 = vunpack.c.l.b16 %v188
    %v490 = vunpack.c.h.b16 %v188
    %v491 = vunpack.c.l.b16 %v189
    %v492 = vunpack.c.h.b16 %v189
    %v493 = vunpack.c.l.b16 %v190
    %v494 = vunpack.c.h.b16 %v190
    %v495 = vunpack.c.l.b16 %v191
    %v496 = vunpack.c.h.b16 %v191
    %v497 = vunpack.c.l.b16 %v192
    %v498 = vunpack.c.h.b16 %v192
    %v499 = vpack.c.b16 %v305, %v303
    %v500 = vpack.c.b16 %v306, %v304
    %v501 = vpack.c.b16 %v309, %v307
    %v502 = vpack.c.b16 %v310, %v308
    %v503 = vpack.c.b16 %v313, %v311
    %v504 = vpack.c.b16 %v314, %v312
    %v505 = vpack.c.b16 %v317, %v315
    %v506 = vpack.c.b16 %v318, %v316
    %v507 = vpack.c.b16 %v321, %v319
    %v508 = vpack.c.b16 %v322, %v320
    %v509 = vpack.c.b16 %v325, %v323
    %v510 = vpack.c.b16 %v326, %v324
    %v511 = vpack.c.b16 %v329, %v327
    %v512 = vpack.c.b16 %v330, %v328
    %v513 = vpack.c.b16 %v333, %v331
    %v514 = vpack.c.b16 %v334, %v332
    %v515 = vpack.c.b16 %v337, %v335
    %v516 = vpack.c.b16 %v338, %v336
    %v517 = vpack.c.b16 %v341, %v339
    %v518 = vpack.c.b16 %v342, %v340
    %v519 = vpack.c.b16 %v345, %v343
    %v520 = vpack.c.b16 %v346, %v344
    %v521 = vpack.c.b16 %v349, %v347
    %v522 = vpack.c.b16 %v350, %v348
    %v523 = vpack.c.b16 %v353, %v351
    %v524 = vpack.c.b16 %v354, %v352
    %v525 = vpack.c.b16 %v357, %v355
    %v526 = vpack.c.b16 %v358, %v356
    %v527 = vpack.c.b16 %v361, %v359
    %v528 = vpack.c.b16 %v362, %v360
    %v529 = vpack.c.b16 %v365, %v363
    %v530 = vpack.c.b16 %v366, %v364
    %v531 = vpack.c.b16 %v369, %v367
    %v532 = vpack.c.b16 %v370, %v368
    %v533 = vpack.c.b16 %v373, %v371
    %v534 = vpack.c.b16 %v374, %v372
    %v535 = vpack.c.b16 %v377, %v375
    %v536 = vpack.c.b16 %v378, %v376
    %v537 = vpack.c.b16 %v381, %v379
    %v538 = vpack.c.b16 %v382, %v380
    %v539 = vpack.c.b16 %v385, %v383
    %v540 = vpack.c.b16 %v386, %v384
    %v541 = vpack.c.b16 %v389, %v387
    %v542 = vpack.c.b16 %v390, %v388
    %v543 = vpack.c.b16 %v393, %v391
    %v544 = vpack.c.b16 %v394, %v392
    %v545 = vpack.c.b16 %v397, %v395
    %v546 = vpack.c.b16 %v398, %v396
    %v547 = vpack.c.b16 %v401, %v399
    %v548 = vpack.c.b16 %v402, %v400
    %v549 = vpack.c.b16 %v405, %v403
    %v550 = vpack.c.b16 %v406, %v404
    %v551 = vpack.c.b16 %v409, %v407
    %v552 = vpack.c.b16 %v410, %v408
    %v553 = vpack.c.b16 %v413, %v411
    %v554 = vpack.c.b16 %v414, %v412
    %v555 = vpack.c.b16 %v417, %v415
    %v556 = vpack.c.b16 %v418, %v416
    %v557 = vpack.c.b16 %v421, %v419
    %v558 = vpack.c.b16 %v422, %v420
    %v559 = vpack.c.b16 %v425, %v423
    %v560 = vpack.c.b16 %v426, %v424
    %v561 = vpack.c.b16 %v429, %v427
    %v562 = vpack.c.b16 %v430, %v428
    %v563 = vpack.c.b16 %v433, %v431
    %v564 = vpack.c.b16 %v434, %v432
    %v565 = vpack.c.b16 %v437, %v435
    %v566 = vpack.c.b16 %v438, %v436
    %v567 = vpack.c.b16 %v441, %v439
    %v568 = vpack.c.b16 %v442, %v440
    %v569 = vpack.c.b16 %v445, %v443
    %v570 = vpack.c.b16 %v446, %v444
    %v571 = vpack.c.b16 %v449, %v447
    %v572 = vpack.c.b16 %v450, %v448
    %v573 = vpack.c.b16 %v453, %v451
    %v574 = vpack.c.b16 %v454, %v452
    %v575 = vpack.c.b16 %v457, %v455
    %v576 = vpack.c.b16 %v458, %v456
    %v577 = vpack.c.b16 %v461, %v459
    %v578 = vpack.c.b16 %v462, %v460
    %v579 = vpack.c.b16 %v465, %v463
    %v580 = vpack.c.b16 %v466, %v464
    %v581 = vpack.c.b16 %v469, %v467
    %v582 = vpack.c.b16 %v470, %v468
    %v583 = vpack.c.b16 %v473, %v471
    %v584 = vpack.c.b16 %v474, %v472
    %v585 = vpack.c.b16 %v477, %v475
    %v586 = vpack.c.b16 %v478, %v476
    %v587 = vpack.c.b16 %v481, %v479
    %v588 = vpack.c.b16 %v482, %v480
    %v589 = vpack.c.b16 %v485, %v483
    %v590 = vpack.c.b16 %v486, %v484
    %v591 = vpack.c.b16 %v489, %v487
    %v592 = vpack.c.b16 %v490, %v488
    %v593 = vpack.c.b16 %v493, %v491
    %v594 = vpack.c.b16 %v494, %v492
    %v595 = vpack.c.b16 %v497, %v495
    %v596 = vpack.c.b16 %v498, %v496
    %vm695 = vcmask 130048
    %v697 = vsel %vm695, %v94, 0
    %699 = vmatprep.subr.bf16.mxu0 %v500
    %700 = vmatpush1.bf16.msra.mxu0 %v499
    %701 = vmatprep.subr.bf16.mxu0 %v502
    %702 = vmatpush1.bf16.msra.mxu0 %v501
    %703 = vmatprep.subr.bf16.mxu0 %v504
    %704 = vmatpush1.bf16.msra.mxu0 %v503
    %705 = vmatprep.subr.bf16.mxu0 %v506
    %706 = vmatpush1.bf16.msra.mxu0 %v505
    %707 = vmatprep.subr.bf16.mxu0 %v508
    %708 = vmatpush1.bf16.msra.mxu0 %v507
    %709 = vmatprep.subr.bf16.mxu0 %v510
    %710 = vmatpush1.bf16.msra.mxu0 %v509
    %711 = vmatprep.subr.bf16.mxu0 %v512
    %712 = vmatpush1.bf16.msra.mxu0 %v511
    %713 = vmatprep.subr.bf16.mxu0 %v514
    %714 = vmatpush1.bf16.msra.mxu0 %v513
    %715 = vmatprep.subr.bf16.mxu0 %v516
    %716 = vmatpush1.bf16.msra.mxu0 %v515
    %717 = vmatprep.subr.bf16.mxu0 %v518
    %718 = vmatpush1.bf16.msra.mxu0 %v517
    %719 = vmatprep.subr.bf16.mxu0 %v520
    %720 = vmatpush1.bf16.msra.mxu0 %v519
    %721 = vmatprep.subr.bf16.mxu0 %v522
    %722 = vmatpush1.bf16.msra.mxu0 %v521
    %723 = vmatprep.subr.bf16.mxu0 %v524
    %724 = vmatpush1.bf16.msra.mxu0 %v523
    %725 = vmatprep.subr.bf16.mxu0 %v526
    %726 = vmatpush1.bf16.msra.mxu0 %v525
    %727 = vmatprep.subr.bf16.mxu0 %v528
    %728 = vmatpush1.bf16.msra.mxu0 %v527
    %729 = vmatprep.subr.bf16.mxu0 %v530
    %730 = vmatpush1.bf16.msra.mxu0 %v529
    %731 = vmatprep.mubr.bf16.mxu0 %v89
    %732 = vmatmul.mubr.bf16.gmra.mrb[0].mxu0 %v88
    %v733 = vpop.f32.mrb[0].mxu0
    %v734 = vadd.f32 %v198, %v733
    %v735 = vpop.f32.mrb[0].mxu0
    %v736 = vadd.f32 %v202, %v735
    %v737 = vpop.f32.mrb[0].mxu0
    %v738 = vpop.f32.mrb[0].mxu0
    %739 = vdwg.mxu0
    %740 = vmatprep.subr.bf16.mxu0 %v532
    %741 = vmatpush1.bf16.msra.mxu0 %v531
    %742 = vmatprep.subr.bf16.mxu0 %v534
    %743 = vmatpush1.bf16.msra.mxu0 %v533
    %744 = vmatprep.subr.bf16.mxu0 %v536
    %745 = vmatpush1.bf16.msra.mxu0 %v535
    %746 = vmatprep.subr.bf16.mxu0 %v538
    %747 = vmatpush1.bf16.msra.mxu0 %v537
    %748 = vmatprep.subr.bf16.mxu0 %v540
    %749 = vmatpush1.bf16.msra.mxu0 %v539
    %750 = vmatprep.subr.bf16.mxu0 %v542
    %751 = vmatpush1.bf16.msra.mxu0 %v541
    %752 = vmatprep.subr.bf16.mxu0 %v544
    %753 = vmatpush1.bf16.msra.mxu0 %v543
    %754 = vmatprep.subr.bf16.mxu0 %v546
    %755 = vmatpush1.bf16.msra.mxu0 %v545
    %756 = vmatprep.subr.bf16.mxu0 %v548
    %757 = vmatpush1.bf16.msra.mxu0 %v547
    %758 = vmatprep.subr.bf16.mxu0 %v550
    %759 = vmatpush1.bf16.msra.mxu0 %v549
    %760 = vmatprep.subr.bf16.mxu0 %v552
    %761 = vmatpush1.bf16.msra.mxu0 %v551
    %762 = vmatprep.subr.bf16.mxu0 %v554
    %763 = vmatpush1.bf16.msra.mxu0 %v553
    %764 = vmatprep.subr.bf16.mxu0 %v556
    %765 = vmatpush1.bf16.msra.mxu0 %v555
    %766 = vmatprep.subr.bf16.mxu0 %v558
    %767 = vmatpush1.bf16.msra.mxu0 %v557
    %768 = vmatprep.subr.bf16.mxu0 %v560
    %769 = vmatpush1.bf16.msra.mxu0 %v559
    %770 = vmatprep.subr.bf16.mxu0 %v562
    %771 = vmatpush1.bf16.msra.mxu0 %v561
    %772 = vmatprep.mubr.bf16.mxu0 %v91
    %773 = vmatmul.mubr.bf16.gmra.mrb[0].mxu0 %v90
    %v774 = vpop.f32.mrb[0].mxu0
    %v775 = vadd.f32 %v734, %v774
    %v776 = vpop.f32.mrb[0].mxu0
    %v777 = vadd.f32 %v736, %v776
    %v778 = vpop.f32.mrb[0].mxu0
    %v779 = vpop.f32.mrb[0].mxu0
    %780 = vdwg.mxu0
    %781 = vmatprep.subr.bf16.mxu0 %v564
    %782 = vmatpush1.bf16.msra.mxu0 %v563
    %783 = vmatprep.subr.bf16.mxu0 %v566
    %784 = vmatpush1.bf16.msra.mxu0 %v565
    %785 = vmatprep.subr.bf16.mxu0 %v568
    %786 = vmatpush1.bf16.msra.mxu0 %v567
    %787 = vmatprep.subr.bf16.mxu0 %v570
    %788 = vmatpush1.bf16.msra.mxu0 %v569
    %789 = vmatprep.subr.bf16.mxu0 %v572
    %790 = vmatpush1.bf16.msra.mxu0 %v571
    %791 = vmatprep.subr.bf16.mxu0 %v574
    %792 = vmatpush1.bf16.msra.mxu0 %v573
    %793 = vmatprep.subr.bf16.mxu0 %v576
    %794 = vmatpush1.bf16.msra.mxu0 %v575
    %795 = vmatprep.subr.bf16.mxu0 %v578
    %796 = vmatpush1.bf16.msra.mxu0 %v577
    %797 = vmatprep.subr.bf16.mxu0 %v580
    %798 = vmatpush1.bf16.msra.mxu0 %v579
    %799 = vmatprep.subr.bf16.mxu0 %v582
    %800 = vmatpush1.bf16.msra.mxu0 %v581
    %801 = vmatprep.subr.bf16.mxu0 %v584
    %802 = vmatpush1.bf16.msra.mxu0 %v583
    %803 = vmatprep.subr.bf16.mxu0 %v586
    %804 = vmatpush1.bf16.msra.mxu0 %v585
    %805 = vmatprep.subr.bf16.mxu0 %v588
    %806 = vmatpush1.bf16.msra.mxu0 %v587
    %807 = vmatprep.subr.bf16.mxu0 %v590
    %808 = vmatpush1.bf16.msra.mxu0 %v589
    %809 = vmatprep.subr.bf16.mxu0 %v592
    %810 = vmatpush1.bf16.msra.mxu0 %v591
    %811 = vmatprep.subr.bf16.mxu0 %v594
    %812 = vmatpush1.bf16.msra.mxu0 %v593
    %813 = vmatprep.mubr.bf16.mxu0 %v93
    %814 = vmatmul.mubr.bf16.gmra.mrb[0].mxu0 %v92
    %v815 = vpop.f32.mrb[0].mxu0
    %v816 = vadd.f32 %v775, %v815
    %v817 = vpop.f32.mrb[0].mxu0
    %v818 = vadd.f32 %v777, %v817
    %v819 = vpop.f32.mrb[0].mxu0
    %v820 = vpop.f32.mrb[0].mxu0
    %821 = vdwg.mxu0
    %822 = vmatprep.subr.bf16.mxu0 %v596
    %823 = vmatpush1.bf16.msra.mxu0 %v595
    %824 = vmatprep.subr.bf16.mxu0 0
    %825 = vmatpush1.bf16.msra.mxu0 0
    %826 = vmatprep.subr.bf16.mxu0 0
    %827 = vmatpush1.bf16.msra.mxu0 0
    %828 = vmatprep.subr.bf16.mxu0 0
    %829 = vmatpush1.bf16.msra.mxu0 0
    %830 = vmatprep.subr.bf16.mxu0 0
    %831 = vmatpush1.bf16.msra.mxu0 0
    %832 = vmatprep.subr.bf16.mxu0 0
    %833 = vmatpush1.bf16.msra.mxu0 0
    %834 = vmatprep.subr.bf16.mxu0 0
    %835 = vmatpush1.bf16.msra.mxu0 0
    %836 = vmatprep.subr.bf16.mxu0 0
    %837 = vmatpush1.bf16.msra.mxu0 0
    %838 = vmatprep.subr.bf16.mxu0 0
    %839 = vmatpush1.bf16.msra.mxu0 0
    %840 = vmatprep.subr.bf16.mxu0 0
    %841 = vmatpush1.bf16.msra.mxu0 0
    %842 = vmatprep.subr.bf16.mxu0 0
    %843 = vmatpush1.bf16.msra.mxu0 0
    %844 = vmatprep.subr.bf16.mxu0 0
    %845 = vmatpush1.bf16.msra.mxu0 0
    %846 = vmatprep.subr.bf16.mxu0 0
    %847 = vmatpush1.bf16.msra.mxu0 0
    %848 = vmatprep.subr.bf16.mxu0 0
    %849 = vmatpush1.bf16.msra.mxu0 0
    %850 = vmatprep.subr.bf16.mxu0 0
    %851 = vmatpush1.bf16.msra.mxu0 0
    %852 = vmatprep.subr.bf16.mxu0 0
    %853 = vmatpush1.bf16.msra.mxu0 0
    %854 = vmatprep.mubr.bf16.mxu0 0
    %855 = vmatmul.mubr.bf16.gmra.mrb[0].mxu0 %v697
    %v856 = vpop.f32.mrb[0].mxu0
    %v857 = vadd.f32 %v816, %v856
    %v858 = vpop.f32.mrb[0].mxu0
    %v859 = vadd.f32 %v818, %v858
    %v860 = vpop.f32.mrb[0].mxu0
    %v861 = vpop.f32.mrb[0].mxu0
    %862 = vdwg.mxu0
    %v863 = vmax.f32 %v857, 0.0
    %v864 = vmax.f32 %v859, 0.0
    %v865 = vpack.c.bf16 %v863, %v863
    %v866 = vpack.c.bf16 %v864, %v864
    %v867 = vld [vmem:[#allocation7] sm:$0xf]
    %v868 = vld [vmem:[#allocation7 + $0x4] sm:$0xf]
    %v869 = vld [vmem:[#allocation7 + $0x8] sm:$0xf]
    %v870 = vld [vmem:[#allocation7 + $0xc] sm:$0xf]
    %v871 = vld [vmem:[#allocation7 + $0x10] sm:$0xf]
    %v872 = vld [vmem:[#allocation7 + $0x14] sm:$0xf]
    %v873 = vld [vmem:[#allocation7 + $0x18] sm:$0xf]
    %v874 = vld [vmem:[#allocation7 + $0x1c] sm:$0xf]
    %v875 = vld [vmem:[#allocation7 + $0x20] sm:$0xf]
    %v876 = vld [vmem:[#allocation7 + $0x24] sm:$0xf]
    %v877 = vld [vmem:[#allocation7 + $0x28] sm:$0xf]
    %v878 = vld [vmem:[#allocation7 + $0x2c] sm:$0xf]
    %v879 = vld [vmem:[#allocation7 + $0x30] sm:$0xf]
    %v880 = vld [vmem:[#allocation7 + $0x34] sm:$0xf]
    %v881 = vld [vmem:[#allocation7 + $0x38] sm:$0xf]
    %v882 = vld [vmem:[#allocation7 + $0x3c] sm:$0xf]
    %v883 = vld [vmem:[#allocation7 + $0x40] sm:$0xf]
    %v884 = vld [vmem:[#allocation7 + $0x44] sm:$0xf]
    %v885 = vld [vmem:[#allocation7 + $0x48] sm:$0xf]
    %v886 = vld [vmem:[#allocation7 + $0x4c] sm:$0xf]
    %v887 = vld [vmem:[#allocation7 + $0x50] sm:$0xf]
    %v888 = vld [vmem:[#allocation7 + $0x54] sm:$0xf]
    %v889 = vld [vmem:[#allocation7 + $0x58] sm:$0xf]
    %v890 = vld [vmem:[#allocation7 + $0x5c] sm:$0xf]
    %v891 = vld [vmem:[#allocation7 + $0x60] sm:$0xf]
    %v892 = vld [vmem:[#allocation7 + $0x64] sm:$0xf]
    %v893 = vld [vmem:[#allocation7 + $0x68] sm:$0xf]
    %v894 = vld [vmem:[#allocation7 + $0x6c] sm:$0xf]
    %v895 = vld [vmem:[#allocation7 + $0x70] sm:$0xf]
    %v896 = vld [vmem:[#allocation7 + $0x74] sm:$0xf]
    %v897 = vld [vmem:[#allocation7 + $0x78] sm:$0xf]
    %v898 = vld [vmem:[#allocation7 + $0x7c] sm:$0xf]
    %v899 = vld [vmem:[%s4] sm:$0x1]
    %v901 = vlaneseq
    %v902 = vshrl.u32 %v901, 7
    %v903 = vsub.s32 0, %v902
    %v904 = vrot.slane %v899, %v903
    %v938 = vunpack.c.l.b16 %v867
    %v939 = vunpack.c.l.b16 %v868
    %v940 = vunpack.c.l.b16 %v869
    %v941 = vunpack.c.l.b16 %v870
    %v942 = vunpack.c.l.b16 %v871
    %v943 = vunpack.c.l.b16 %v872
    %v944 = vunpack.c.l.b16 %v873
    %v945 = vunpack.c.l.b16 %v874
    %v946 = vunpack.c.l.b16 %v875
    %v947 = vunpack.c.l.b16 %v876
    %v948 = vunpack.c.l.b16 %v877
    %v949 = vunpack.c.l.b16 %v878
    %v950 = vunpack.c.l.b16 %v879
    %v951 = vunpack.c.l.b16 %v880
    %v952 = vunpack.c.l.b16 %v881
    %v953 = vunpack.c.l.b16 %v882
    %v954 = vunpack.c.l.b16 %v883
    %v955 = vunpack.c.l.b16 %v884
    %v956 = vunpack.c.l.b16 %v885
    %v957 = vunpack.c.l.b16 %v886
    %v958 = vunpack.c.l.b16 %v887
    %v959 = vunpack.c.l.b16 %v888
    %v960 = vunpack.c.l.b16 %v889
    %v961 = vunpack.c.l.b16 %v890
    %v962 = vunpack.c.l.b16 %v891
    %v963 = vunpack.c.l.b16 %v892
    %v964 = vunpack.c.l.b16 %v893
    %v965 = vunpack.c.l.b16 %v894
    %v966 = vunpack.c.l.b16 %v895
    %v967 = vunpack.c.l.b16 %v896
    %v968 = vunpack.c.l.b16 %v897
    %v969 = vunpack.c.l.b16 %v898
    %v970 = vpack.c.b16 %v939, %v938
    %v971 = vpack.c.b16 %v941, %v940
    %v972 = vpack.c.b16 %v943, %v942
    %v973 = vpack.c.b16 %v945, %v944
    %v974 = vpack.c.b16 %v947, %v946
    %v975 = vpack.c.b16 %v949, %v948
    %v976 = vpack.c.b16 %v951, %v950
    %v977 = vpack.c.b16 %v953, %v952
    %v978 = vpack.c.b16 %v955, %v954
    %v979 = vpack.c.b16 %v957, %v956
    %v980 = vpack.c.b16 %v959, %v958
    %v981 = vpack.c.b16 %v961, %v960
    %v982 = vpack.c.b16 %v963, %v962
    %v983 = vpack.c.b16 %v965, %v964
    %v984 = vpack.c.b16 %v967, %v966
    %v985 = vpack.c.b16 %v969, %v968
    %1002 = vmatprep.subr.bf16.mxu0 0
    %1003 = vmatpush1.bf16.msra.mxu0 %v970
    %1004 = vmatprep.subr.bf16.mxu0 0
    %1005 = vmatpush1.bf16.msra.mxu0 %v971
    %1006 = vmatprep.subr.bf16.mxu0 0
    %1007 = vmatpush1.bf16.msra.mxu0 %v972
    %1008 = vmatprep.subr.bf16.mxu0 0
    %1009 = vmatpush1.bf16.msra.mxu0 %v973
    %1010 = vmatprep.subr.bf16.mxu0 0
    %1011 = vmatpush1.bf16.msra.mxu0 %v974
    %1012 = vmatprep.subr.bf16.mxu0 0
    %1013 = vmatpush1.bf16.msra.mxu0 %v975
    %1014 = vmatprep.subr.bf16.mxu0 0
    %1015 = vmatpush1.bf16.msra.mxu0 %v976
    %1016 = vmatprep.subr.bf16.mxu0 0
    %1017 = vmatpush1.bf16.msra.mxu0 %v977
    %1018 = vmatprep.subr.bf16.mxu0 0
    %1019 = vmatpush1.bf16.msra.mxu0 %v978
    %1020 = vmatprep.subr.bf16.mxu0 0
    %1021 = vmatpush1.bf16.msra.mxu0 %v979
    %1022 = vmatprep.subr.bf16.mxu0 0
    %1023 = vmatpush1.bf16.msra.mxu0 %v980
    %1024 = vmatprep.subr.bf16.mxu0 0
    %1025 = vmatpush1.bf16.msra.mxu0 %v981
    %1026 = vmatprep.subr.bf16.mxu0 0
    %1027 = vmatpush1.bf16.msra.mxu0 %v982
    %1028 = vmatprep.subr.bf16.mxu0 0
    %1029 = vmatpush1.bf16.msra.mxu0 %v983
    %1030 = vmatprep.subr.bf16.mxu0 0
    %1031 = vmatpush1.bf16.msra.mxu0 %v984
    %1032 = vmatprep.subr.bf16.mxu0 0
    %1033 = vmatpush1.bf16.msra.mxu0 %v985
    %1034 = vmatprep.mubr.bf16.mxu0 %v866
    %1035 = vmatmul.mubr.bf16.gmra.mrb[0].mxu0 %v865
    %v1036 = vpop.f32.mrb[0].mxu0
    %v1037 = vadd.f32 %v904, %v1036
    %v1038 = vpop.f32.mrb[0].mxu0
    %v1039 = vpop.f32.mrb[0].mxu0
    %v1040 = vpop.f32.mrb[0].mxu0
    %1041 = vdwg.mxu0
    %v1042 = vmax.f32 %v1037, 0.0
    %v1043 = vpack.c.bf16 %v1042, %v1042
    %v1044 = vld [vmem:[#allocation8] sm:$0xf]
    %v1045 = vld [vmem:[#allocation8 + $0x4] sm:$0xf]
    %v1046 = vld [vmem:[#allocation8 + $0x8] sm:$0xf]
    %v1047 = vld [vmem:[#allocation8 + $0xc] sm:$0xf]
    %v1048 = vld [vmem:[#allocation8 + $0x10] sm:$0xf]
    %v1049 = vld [vmem:[#allocation8 + $0x14] sm:$0xf]
    %v1050 = vld [vmem:[#allocation8 + $0x18] sm:$0xf]
    %v1051 = vld [vmem:[#allocation8 + $0x1c] sm:$0xf]
    %v1052 = vld [vmem:[#allocation8 + $0x20] sm:$0xf]
    %v1053 = vld [vmem:[#allocation8 + $0x24] sm:$0xf]
    %v1054 = vld [vmem:[#allocation8 + $0x28] sm:$0xf]
    %v1055 = vld [vmem:[#allocation8 + $0x2c] sm:$0xf]
    %v1056 = vld [vmem:[#allocation8 + $0x30] sm:$0xf]
    %v1057 = vld [vmem:[#allocation8 + $0x34] sm:$0xf]
    %v1058 = vld [vmem:[#allocation8 + $0x38] sm:$0xf]
    %v1059 = vld [vmem:[#allocation8 + $0x3c] sm:$0xf]
    %v1060 = vld [vmem:[%s6] sm:$0x1]
    %v1062 = vlaneseq
    %v1063 = vshrl.u32 %v1062, 7
    %v1064 = vsub.s32 0, %v1063
    %v1065 = vrot.slane %v1060, %v1064
    %v1083 = vunpack.c.l.b16 %v1044
    %v1084 = vunpack.c.l.b16 %v1045
    %v1085 = vunpack.c.l.b16 %v1046
    %v1086 = vunpack.c.l.b16 %v1047
    %v1087 = vunpack.c.l.b16 %v1048
    %v1088 = vunpack.c.l.b16 %v1049
    %v1089 = vunpack.c.l.b16 %v1050
    %v1090 = vunpack.c.l.b16 %v1051
    %v1091 = vunpack.c.l.b16 %v1052
    %v1092 = vunpack.c.l.b16 %v1053
    %v1093 = vunpack.c.l.b16 %v1054
    %v1094 = vunpack.c.l.b16 %v1055
    %v1095 = vunpack.c.l.b16 %v1056
    %v1096 = vunpack.c.l.b16 %v1057
    %v1097 = vunpack.c.l.b16 %v1058
    %v1098 = vunpack.c.l.b16 %v1059
    %v1099 = vpack.c.b16 %v1084, %v1083
    %v1100 = vpack.c.b16 %v1086, %v1085
    %v1101 = vpack.c.b16 %v1088, %v1087
    %v1102 = vpack.c.b16 %v1090, %v1089
    %v1103 = vpack.c.b16 %v1092, %v1091
    %v1104 = vpack.c.b16 %v1094, %v1093
    %v1105 = vpack.c.b16 %v1096, %v1095
    %v1106 = vpack.c.b16 %v1098, %v1097
    %1115 = vmatprep.subr.bf16.mxu0 0
    %1116 = vmatpush1.bf16.msra.mxu0 %v1099
    %1117 = vmatprep.subr.bf16.mxu0 0
    %1118 = vmatpush1.bf16.msra.mxu0 %v1100
    %1119 = vmatprep.subr.bf16.mxu0 0
    %1120 = vmatpush1.bf16.msra.mxu0 %v1101
    %1121 = vmatprep.subr.bf16.mxu0 0
    %1122 = vmatpush1.bf16.msra.mxu0 %v1102
    %1123 = vmatprep.subr.bf16.mxu0 0
    %1124 = vmatpush1.bf16.msra.mxu0 %v1103
    %1125 = vmatprep.subr.bf16.mxu0 0
    %1126 = vmatpush1.bf16.msra.mxu0 %v1104
    %1127 = vmatprep.subr.bf16.mxu0 0
    %1128 = vmatpush1.bf16.msra.mxu0 %v1105
    %1129 = vmatprep.subr.bf16.mxu0 0
    %1130 = vmatpush1.bf16.msra.mxu0 %v1106
    %1131 = vmatprep.subr.bf16.mxu0 0
    %1132 = vmatpush1.bf16.msra.mxu0 0
    %1133 = vmatprep.subr.bf16.mxu0 0
    %1134 = vmatpush1.bf16.msra.mxu0 0
    %1135 = vmatprep.subr.bf16.mxu0 0
    %1136 = vmatpush1.bf16.msra.mxu0 0
    %1137 = vmatprep.subr.bf16.mxu0 0
    %1138 = vmatpush1.bf16.msra.mxu0 0
    %1139 = vmatprep.subr.bf16.mxu0 0
    %1140 = vmatpush1.bf16.msra.mxu0 0
    %1141 = vmatprep.subr.bf16.mxu0 0
    %1142 = vmatpush1.bf16.msra.mxu0 0
    %1143 = vmatprep.subr.bf16.mxu0 0
    %1144 = vmatpush1.bf16.msra.mxu0 0
    %1145 = vmatprep.subr.bf16.mxu0 0
    %1146 = vmatpush1.bf16.msra.mxu0 0
    %1147 = vmatprep.mubr.bf16.mxu0 0
    %1148 = vmatmul.mubr.bf16.gmra.mrb[0].mxu0 %v1043
    %v1149 = vpop.f32.mrb[0].mxu0
    %v1150 = vadd.f32 %v1065, %v1149
    %v1151 = vpop.f32.mrb[0].mxu0
    %v1152 = vpop.f32.mrb[0].mxu0
    %v1153 = vpop.f32.mrb[0].mxu0
    %1154 = vdwg.mxu0
    %v1155 = vpack.c.bf16 %v1150, %v1150
    %1156 = vst [vmem:[#allocation10] sm:$0xf] %v1155
    // Predicated region
    $region46: #{tpu_custom_call.1} parent=1 // pred_check
      _
    $region47: #{tpu_custom_call.1} parent=1 // pred_check_branch
      %1158 = sbr.rel (0) target = $region49
    $region48: #{tpu_custom_call.1} parent=1 // pred_region
      %s1160 = ssub.s32 64, 64
      %1161 = vsyncadd [#allocation4], %s1160
      %s1163 = sshll.u32 [#allocation10], 4
      %s1164 = int_to_ptr.vmem [resolvable:$true] %s1163
      %1166 = dma.vmem_to_hbm [thread:$0]  %s1164, 64, %s7, [#allocation4]
    $region49: #{tpu_custom_call.1} parent=1 // pred_fallthru
      _
    // Predicated region
    $region50: #{tpu_custom_call.1} parent=1 // pred_check
      _
    $region51: #{tpu_custom_call.1} parent=1 // pred_check_branch
      %1168 = sbr.rel (0) target = $region53
    $region52: #{tpu_custom_call.1} parent=1 // pred_region
      %1169 = dma.done [#allocation4], 64
    $region53: #{tpu_custom_call.1} parent=1 // pred_fallthru
      _
    %1170 = vsyncpa [#allocation3], 1
    %1171 = vsyncpa [#allocation6], 1
    %1172 = vsyncpa [#allocation9], 1
    %1173 = vsyncpa [#allocation4], 1

</llo_original>
